<compile_context>
chip_gen: v6e
topology: v6e:2x2x1
jax: 0.10.0
libtpu: 0.0.40
codegen_flags: <defaults>
</compile_context>

<pallas_src>
import jax
import jax.numpy as jnp
from jax.experimental import pallas as pl
from jax.experimental.pallas import tpu as pltpu


def _num_tensorcores() -> int:
    """Best-effort count of TensorCores reachable via the 'parallel' axis."""
    try:
        kind = jax.devices()[0].device_kind.lower()
    except Exception:
        return 1
    if any(tag in kind for tag in ("v7", "7x", "v4", "v5p")):
        return 2
    return 1


# ----------------------------------------------------------------------------
# Fused kernel factory (all shape params are static Python ints)
# ----------------------------------------------------------------------------
def _make_fused_kernel(ho, wo, cin, cmid, cout, bn):
    p = ho * wo            # output pixels per image (64)
    L = bn * p             # lanes per quadrant slab (bn images folded)

    def kernel(x_ref, prm_ref, o_ref):
        # x_ref  : (1, cin, 4*L)   lanes = quadrant-major, image, pixel
        # prm_ref: (cmid, 78) = [w2big(72) | w1(cin) | b1(1) | b2(1)]
        # o_ref  : (1, bn*cout//2, 2*p)   NCHW-flat per block, 128-lane rows
        x = x_ref[0]                                        # (cin, 4L)
        prm = prm_ref[...]                                  # (8, 78)
        w2b = prm[:, 0:72]                                  # (8, 72)
        w1 = prm[:, 72:72 + cin]                            # (8, cin)
        b1 = prm[:, 72 + cin:73 + cin]                      # (8, 1)
        b2 = prm[:, 73 + cin:74 + cin]                      # (8, 1)

        # -------- conv1 (1x1) as VPU broadcast FMAs, f32 ---------------------
        v1 = w1[:, 0:1] * x[0:1, :]
        for ci in range(1, cin):
            v1 = v1 + w1[:, ci:ci + 1] * x[ci:ci + 1, :]
        v1 = v1 + b1                                        # (cmid, 4L)

        # -------- exact erf-GELU ----------------------------------------------
        v6 = (v1 * 0.5) * (jax.lax.erf(v1 * 0.7071067811865476) + 1.0)

        # -------- conv2: 3x3 / stride 2 / pad 1 / groups=2 on the MXU ---------
        # Hoisted whole-array rolls for the three nonzero tap shifts.
        v6_r1 = jnp.roll(v6, 1, axis=1)
        v6_rw = jnp.roll(v6, wo, axis=1)
        v6_rw1 = jnp.roll(v6, wo + 1, axis=1)
        rolled = {0: v6, 1: v6_r1, wo: v6_rw, wo + 1: v6_rw1}

        # Hoisted border masks (per-image pixel index inside a quadrant slab).
        pix = jax.lax.broadcasted_iota(jnp.int32, (cmid, L), 1) % p
        not_top = pix >= wo                 # output row i > 0
        not_left = (pix % wo) != 0          # output col j > 0
        not_tl = jnp.logical_and(not_top, not_left)

        # Tap (kh,kw) for output (i,j) reads quadrant (eh,ew)=(kh!=1, kw!=1)
        # at (u,v)=(i-[kh==0], j-[kw==0]) == lane (l_out - shift); the roll
        # realizes the shift and the masks realize the zero padding.
        taps = []
        for kh in range(3):
            eh = 0 if kh == 1 else 1
            for kw in range(3):
                ew = 0 if kw == 1 else 1
                q = eh * 2 + ew
                shift = (wo if kh == 0 else 0) + (1 if kw == 0 else 0)
                slab = rolled[shift][:, q * L:(q + 1) * L]  # (cmid, L)
                if kh == 0 and kw == 0:
                    slab = jnp.where(not_tl, slab, 0.0)
                elif kh == 0:
                    slab = jnp.where(not_top, slab, 0.0)
                elif kw == 0:
                    slab = jnp.where(not_left, slab, 0.0)
                taps.append(slab)
        t_mat = jnp.concatenate(taps, axis=0)               # (72, L)

        out = jnp.dot(w2b, t_mat,
                      preferred_element_type=jnp.float32) + b2   # (cout, L)

        # -------- pack to NCHW-flat, 128-lane rows ----------------------------
        # row r = n_local*(cout//2) + k holds channels (2k, 2k+1) of image
        # n_local  ->  out.reshape(N, cout, ho, wo) in the wrapper is free.
        rows = []
        for n in range(bn):
            for k in range(0, cout, 2):
                rows.append(jnp.concatenate(
                    [out[k:k + 1, n * p:(n + 1) * p],
                     out[k + 1:k + 2, n * p:(n + 1) * p]], axis=1))
        o_ref[0] = jnp.concatenate(rows, axis=0)            # (bn*cout//2, 2p)

    return kernel


# ----------------------------------------------------------------------------
# Wrapper
# ----------------------------------------------------------------------------
@jax.jit
def model_forward(x_nchw, params):
    N, Cin, H, W = x_nchw.shape
    Cmid, Cout = 8, 8
    Ho, Wo = H // 2, W // 2
    P = Ho * Wo

    # Batch folding: all images in one step on 1-TC chips; >=2 parallel steps
    # on 2-TC chips so both TensorCores get work.  bN capped at 8.
    num_tc = _num_tensorcores()
    bN = max(1, min(8, N // num_tc)) if N >= num_tc else N
    while N % bN:
        bN -= 1
    n_steps = N // bN
    L = bN * P

    # Phase-reorder the input (conv1 is pointwise, so it commutes with any
    # pixel permutation): lane = quadrant(eh,ew)-major, image, pixel so every
    # stride-2 tap becomes a contiguous lane slice of v6 in the kernel.
    xq = x_nchw.reshape(n_steps, bN, Cin, Ho, 2, Wo, 2)
    xq = jnp.transpose(xq, (0, 2, 4, 6, 1, 3, 5)).reshape(n_steps, Cin, 4 * L)

    kernel = _make_fused_kernel(Ho, Wo, Cin, Cmid, Cout, bN)

    out = pl.pallas_call(
        kernel,
        out_shape=jax.ShapeDtypeStruct((n_steps, bN * Cout // 2, 2 * P),
                                       jnp.float32),
        grid_spec=pltpu.PrefetchScalarGridSpec(
            num_scalar_prefetch=0,
            grid=(n_steps,),
            in_specs=[
                pl.BlockSpec((1, Cin, 4 * L), lambda nb: (nb, 0, 0)),
                pl.BlockSpec(params.shape, lambda nb: (0, 0)),
            ],
            out_specs=pl.BlockSpec((1, bN * Cout // 2, 2 * P),
                                   lambda nb: (nb, 0, 0)),
        ),
        compiler_params=pltpu.CompilerParams(
            dimension_semantics=("parallel",),
            allow_input_fusion=[True, False]),
    )(xq, params)

    # Contiguous (free) reshape straight to NCHW -- no output transpose pass.
    return out.reshape(N, Cout, Ho, Wo)


# ----------------------------------------------------------------------------
# Deterministic synthetic parameters (PyTorch-shaped) + pure-JAX reference
# ----------------------------------------------------------------------------
def make_params():
    key = jax.random.PRNGKey(0)
    k1, k2, k3, k4 = jax.random.split(key, 4)
    w1_oihw = jax.random.normal(k1, (8, 4, 1, 1), jnp.float32) * 0.2
    b1 = jax.random.normal(k2, (8,), jnp.float32) * 0.1
    w2_oihw = jax.random.normal(k3, (8, 4, 3, 3), jnp.float32) * 0.2  # groups=2
    b2 = jax.random.normal(k4, (8,), jnp.float32) * 0.1

    # conv1 weights: (cout=8, cin=4)
    w1k = w1_oihw[:, :, 0, 0]

    # conv2 weights packed for the single in-kernel MXU matmul:
    #   W_big[o, t*8 + c] = w2_oihw[o, c_local, kh, kw] for c in o's group,
    #   0 otherwise (block-diagonal per tap t = kh*3 + kw).
    w2big = jnp.zeros((8, 9, 8), jnp.float32)
    w2g = w2_oihw.reshape(2, 4, 4, 3, 3)                  # (g, co_l, ci_l, kh, kw)
    for g in range(2):
        blk = jnp.transpose(w2g[g], (2, 3, 0, 1)).reshape(9, 4, 4)   # (t, co, ci)
        w2big = w2big.at[g * 4:(g + 1) * 4, :, g * 4:(g + 1) * 4].set(
            jnp.transpose(blk, (1, 0, 2)))                # (co, t, ci)
    w2big = w2big.reshape(8, 72)

    # one consolidated parameter slab: [w2big | w1 | b1 | b2]  -> (8, 78)
    params = jnp.concatenate(
        [w2big, w1k, b1[:, None], b2[:, None]], axis=1).astype(jnp.float32)
    return params, w1_oihw, b1, w2_oihw, b2


def reference_forward(x_nchw, w1_oihw, b1, w2_oihw, b2):
    dn = jax.lax.conv_dimension_numbers(x_nchw.shape, w1_oihw.shape,
                                        ("NCHW", "OIHW", "NCHW"))
    v1 = jax.lax.conv_general_dilated(x_nchw, w1_oihw, (1, 1), "VALID",
                                      dimension_numbers=dn)
    v1 = v1 + b1[None, :, None, None]
    v6 = v1 * 0.5 * (jax.lax.erf(v1 * 0.7071067811865476) + 1.0)
    dn2 = jax.lax.conv_dimension_numbers(v6.shape, w2_oihw.shape,
                                         ("NCHW", "OIHW", "NCHW"))
    v7 = jax.lax.conv_general_dilated(v6, w2_oihw, (2, 2), ((1, 1), (1, 1)),
                                      dimension_numbers=dn2,
                                      feature_group_count=2)
    return v7 + b2[None, :, None, None]


if __name__ == "__main__":
    params, w1_oihw, b1, w2_oihw, b2 = make_params()
    x = jax.random.normal(jax.random.PRNGKey(0), (2, 4, 16, 16), jnp.float32)

    out = jax.block_until_ready(model_forward(x, params))

    ref = reference_forward(x, w1_oihw, b1, w2_oihw, b2)
    assert out.shape == (2, 8, 8, 8), out.shape
    err = float(jnp.max(jnp.abs(out - ref)))
    assert jnp.allclose(out, ref, atol=2e-5, rtol=2e-5), err

    print("KERNEL_OK")
</pallas_src>

<mosaic_0001>
module attributes {stable_mosaic.version = 11 : i64} {
  func.func @kernel(%arg0: i32, %arg1: memref<1x4x512xf32, #tpu.memory_space<vmem>>, %arg2: memref<8x78xf32, #tpu.memory_space<vmem>>, %arg3: memref<1x8x128xf32, #tpu.memory_space<vmem>>) attributes {dimension_semantics = [#tpu.dimension_semantics<parallel>], iteration_bounds = array<i64: 1>, scalar_prefetch = 0 : i64, scratch_operands = 0 : i64, tpu.core_type = #tpu.core_type<tc>, window_params = [{transform_indices = @transform_0, window_bounds = array<i64: 1, 4, 512>}, {pipeline_mode = #tpu.pipeline_mode<synchronous>, transform_indices = @transform_1, window_bounds = array<i64: 8, 78>}, {transform_indices = @transform_2, window_bounds = array<i64: 1, 8, 128>}]} {
    %c0 = arith.constant 0 : index
    %c0_0 = arith.constant 0 : index
    %c0_1 = arith.constant 0 : index
    %0 = vector.load %arg1[%c0, %c0_0, %c0_1] : memref<1x4x512xf32, #tpu.memory_space<vmem>>, vector<1x4x512xf32>
    %1 = vector.shape_cast %0 : vector<1x4x512xf32> to vector<4x512xf32>
    %c0_2 = arith.constant 0 : index
    %c0_3 = arith.constant 0 : index
    %2 = vector.load %arg2[%c0_2, %c0_3] : memref<8x78xf32, #tpu.memory_space<vmem>>, vector<8x78xf32>
    %3 = vector.extract_strided_slice %2 {offsets = [0, 0], sizes = [8, 72], strides = [1, 1]} : vector<8x78xf32> to vector<8x72xf32>
    %4 = vector.extract_strided_slice %2 {offsets = [0, 72], sizes = [8, 4], strides = [1, 1]} : vector<8x78xf32> to vector<8x4xf32>
    %5 = vector.extract_strided_slice %2 {offsets = [0, 76], sizes = [8, 1], strides = [1, 1]} : vector<8x78xf32> to vector<8x1xf32>
    %6 = vector.extract_strided_slice %2 {offsets = [0, 77], sizes = [8, 1], strides = [1, 1]} : vector<8x78xf32> to vector<8x1xf32>
    %7 = vector.extract_strided_slice %4 {offsets = [0, 0], sizes = [8, 1], strides = [1, 1]} : vector<8x4xf32> to vector<8x1xf32>
    %8 = vector.extract_strided_slice %1 {offsets = [0, 0], sizes = [1, 512], strides = [1, 1]} : vector<4x512xf32> to vector<1x512xf32>
    %9 = vector.broadcast %7 : vector<8x1xf32> to vector<8x512xf32>
    %10 = vector.broadcast %8 : vector<1x512xf32> to vector<8x512xf32>
    %11 = arith.mulf %9, %10 : vector<8x512xf32>
    %12 = vector.extract_strided_slice %4 {offsets = [0, 1], sizes = [8, 1], strides = [1, 1]} : vector<8x4xf32> to vector<8x1xf32>
    %13 = vector.extract_strided_slice %1 {offsets = [1, 0], sizes = [1, 512], strides = [1, 1]} : vector<4x512xf32> to vector<1x512xf32>
    %14 = vector.broadcast %12 : vector<8x1xf32> to vector<8x512xf32>
    %15 = vector.broadcast %13 : vector<1x512xf32> to vector<8x512xf32>
    %16 = arith.mulf %14, %15 : vector<8x512xf32>
    %17 = arith.addf %11, %16 : vector<8x512xf32>
    %18 = vector.extract_strided_slice %4 {offsets = [0, 2], sizes = [8, 1], strides = [1, 1]} : vector<8x4xf32> to vector<8x1xf32>
    %19 = vector.extract_strided_slice %1 {offsets = [2, 0], sizes = [1, 512], strides = [1, 1]} : vector<4x512xf32> to vector<1x512xf32>
    %20 = vector.broadcast %18 : vector<8x1xf32> to vector<8x512xf32>
    %21 = vector.broadcast %19 : vector<1x512xf32> to vector<8x512xf32>
    %22 = arith.mulf %20, %21 : vector<8x512xf32>
    %23 = arith.addf %17, %22 : vector<8x512xf32>
    %24 = vector.extract_strided_slice %4 {offsets = [0, 3], sizes = [8, 1], strides = [1, 1]} : vector<8x4xf32> to vector<8x1xf32>
    %25 = vector.extract_strided_slice %1 {offsets = [3, 0], sizes = [1, 512], strides = [1, 1]} : vector<4x512xf32> to vector<1x512xf32>
    %26 = vector.broadcast %24 : vector<8x1xf32> to vector<8x512xf32>
    %27 = vector.broadcast %25 : vector<1x512xf32> to vector<8x512xf32>
    %28 = arith.mulf %26, %27 : vector<8x512xf32>
    %29 = arith.addf %23, %28 : vector<8x512xf32>
    %30 = vector.broadcast %5 : vector<8x1xf32> to vector<8x512xf32>
    %31 = arith.addf %29, %30 : vector<8x512xf32>
    %cst = arith.constant 5.000000e-01 : f32
    %32 = vector.broadcast %cst : f32 to vector<8x512xf32>
    %33 = arith.mulf %31, %32 : vector<8x512xf32>
    %cst_4 = arith.constant 0.707106769 : f32
    %34 = vector.broadcast %cst_4 : f32 to vector<8x512xf32>
    %35 = arith.mulf %31, %34 : vector<8x512xf32>
    %36 = math.erf %35 : vector<8x512xf32>
    %cst_5 = arith.constant 1.000000e+00 : f32
    %37 = vector.broadcast %cst_5 : f32 to vector<8x512xf32>
    %38 = arith.addf %36, %37 : vector<8x512xf32>
    %39 = arith.mulf %33, %38 : vector<8x512xf32>
    %40 = vector.extract_strided_slice %39 {offsets = [0, 511], sizes = [8, 1], strides = [1, 1]} : vector<8x512xf32> to vector<8x1xf32>
    %41 = vector.extract_strided_slice %39 {offsets = [0, 0], sizes = [8, 511], strides = [1, 1]} : vector<8x512xf32> to vector<8x511xf32>
    %42 = tpu.concatenate %40, %41 in 1 : vector<8x1xf32>, vector<8x511xf32> -> vector<8x512xf32>
    %43 = vector.extract_strided_slice %39 {offsets = [0, 504], sizes = [8, 8], strides = [1, 1]} : vector<8x512xf32> to vector<8x8xf32>
    %44 = vector.extract_strided_slice %39 {offsets = [0, 0], sizes = [8, 504], strides = [1, 1]} : vector<8x512xf32> to vector<8x504xf32>
    %45 = tpu.concatenate %43, %44 in 1 : vector<8x8xf32>, vector<8x504xf32> -> vector<8x512xf32>
    %46 = vector.extract_strided_slice %39 {offsets = [0, 503], sizes = [8, 9], strides = [1, 1]} : vector<8x512xf32> to vector<8x9xf32>
    %47 = vector.extract_strided_slice %39 {offsets = [0, 0], sizes = [8, 503], strides = [1, 1]} : vector<8x512xf32> to vector<8x503xf32>
    %48 = tpu.concatenate %46, %47 in 1 : vector<8x9xf32>, vector<8x503xf32> -> vector<8x512xf32>
    %49 = tpu.iota {dimensions = array<i32: 1>} : vector<8x128xi32>
    %c64_i32 = arith.constant 64 : i32
    %c0_i32 = arith.constant 0 : i32
    %50 = arith.cmpi eq, %c64_i32, %c0_i32 : i32
    %c1_i32 = arith.constant 1 : i32
    %51 = arith.select %50, %c1_i32, %c64_i32 : i32
    %52 = vector.broadcast %51 : i32 to vector<8x128xi32>
    %53 = arith.remsi %49, %52 : vector<8x128xi32>
    %c0_i32_6 = arith.constant 0 : i32
    %54 = vector.broadcast %c0_i32_6 : i32 to vector<8x128xi32>
    %55 = arith.cmpi ne, %53, %54 : vector<8x128xi32>
    %c0_i32_7 = arith.constant 0 : i32
    %56 = vector.broadcast %c0_i32_7 : i32 to vector<8x128xi32>
    %57 = arith.cmpi slt, %53, %56 : vector<8x128xi32>
    %c0_i32_8 = arith.constant 0 : i32
    %58 = arith.cmpi slt, %51, %c0_i32_8 : i32
    %59 = vector.broadcast %58 : i1 to vector<8x128xi1>
    %60 = vector.broadcast %59 : vector<8x128xi1> to vector<8x128xi1>
    %61 = arith.xori %57, %60 : vector<8x128xi1>
    %62 = arith.andi %61, %55 : vector<8x128xi1>
    %63 = vector.broadcast %51 : i32 to vector<8x128xi32>
    %64 = arith.addi %53, %63 : vector<8x128xi32>
    %65 = arith.select %62, %64, %53 : vector<8x128xi1>, vector<8x128xi32>
    %c8_i32 = arith.constant 8 : i32
    %66 = vector.broadcast %c8_i32 : i32 to vector<8x128xi32>
    %67 = arith.cmpi sge, %65, %66 : vector<8x128xi32>
    %c8_i32_9 = arith.constant 8 : i32
    %c0_i32_10 = arith.constant 0 : i32
    %68 = arith.cmpi eq, %c8_i32_9, %c0_i32_10 : i32
    %c1_i32_11 = arith.constant 1 : i32
    %69 = arith.select %68, %c1_i32_11, %c8_i32_9 : i32
    %70 = vector.broadcast %69 : i32 to vector<8x128xi32>
    %71 = arith.remsi %65, %70 : vector<8x128xi32>
    %c0_i32_12 = arith.constant 0 : i32
    %72 = vector.broadcast %c0_i32_12 : i32 to vector<8x128xi32>
    %73 = arith.cmpi ne, %71, %72 : vector<8x128xi32>
    %c0_i32_13 = arith.constant 0 : i32
    %74 = vector.broadcast %c0_i32_13 : i32 to vector<8x128xi32>
    %75 = arith.cmpi slt, %71, %74 : vector<8x128xi32>
    %c0_i32_14 = arith.constant 0 : i32
    %76 = arith.cmpi slt, %69, %c0_i32_14 : i32
    %77 = vector.broadcast %76 : i1 to vector<8x128xi1>
    %78 = vector.broadcast %77 : vector<8x128xi1> to vector<8x128xi1>
    %79 = arith.xori %75, %78 : vector<8x128xi1>
    %80 = arith.andi %79, %73 : vector<8x128xi1>
    %81 = vector.broadcast %69 : i32 to vector<8x128xi32>
    %82 = arith.addi %71, %81 : vector<8x128xi32>
    %83 = arith.select %80, %82, %71 : vector<8x128xi1>, vector<8x128xi32>
    %c0_i32_15 = arith.constant 0 : i32
    %84 = vector.broadcast %c0_i32_15 : i32 to vector<8x128xi32>
    %85 = arith.cmpi ne, %83, %84 : vector<8x128xi32>
    %86 = arith.andi %67, %85 : vector<8x128xi1>
    %87 = vector.extract_strided_slice %48 {offsets = [0, 384], sizes = [8, 128], strides = [1, 1]} : vector<8x512xf32> to vector<8x128xf32>
    %cst_16 = arith.constant 0.000000e+00 : f32
    %88 = vector.broadcast %cst_16 : f32 to vector<8x128xf32>
    %89 = arith.select %86, %87, %88 : vector<8x128xi1>, vector<8x128xf32>
    %90 = vector.extract_strided_slice %45 {offsets = [0, 256], sizes = [8, 128], strides = [1, 1]} : vector<8x512xf32> to vector<8x128xf32>
    %cst_17 = arith.constant 0.000000e+00 : f32
    %91 = vector.broadcast %cst_17 : f32 to vector<8x128xf32>
    %92 = arith.select %67, %90, %91 : vector<8x128xi1>, vector<8x128xf32>
    %93 = vector.extract_strided_slice %45 {offsets = [0, 384], sizes = [8, 128], strides = [1, 1]} : vector<8x512xf32> to vector<8x128xf32>
    %cst_18 = arith.constant 0.000000e+00 : f32
    %94 = vector.broadcast %cst_18 : f32 to vector<8x128xf32>
    %95 = arith.select %67, %93, %94 : vector<8x128xi1>, vector<8x128xf32>
    %96 = vector.extract_strided_slice %42 {offsets = [0, 128], sizes = [8, 128], strides = [1, 1]} : vector<8x512xf32> to vector<8x128xf32>
    %cst_19 = arith.constant 0.000000e+00 : f32
    %97 = vector.broadcast %cst_19 : f32 to vector<8x128xf32>
    %98 = arith.select %85, %96, %97 : vector<8x128xi1>, vector<8x128xf32>
    %99 = vector.extract_strided_slice %39 {offsets = [0, 0], sizes = [8, 128], strides = [1, 1]} : vector<8x512xf32> to vector<8x128xf32>
    %100 = vector.extract_strided_slice %39 {offsets = [0, 128], sizes = [8, 128], strides = [1, 1]} : vector<8x512xf32> to vector<8x128xf32>
    %101 = vector.extract_strided_slice %42 {offsets = [0, 384], sizes = [8, 128], strides = [1, 1]} : vector<8x512xf32> to vector<8x128xf32>
    %cst_20 = arith.constant 0.000000e+00 : f32
    %102 = vector.broadcast %cst_20 : f32 to vector<8x128xf32>
    %103 = arith.select %85, %101, %102 : vector<8x128xi1>, vector<8x128xf32>
    %104 = vector.extract_strided_slice %39 {offsets = [0, 256], sizes = [8, 128], strides = [1, 1]} : vector<8x512xf32> to vector<8x128xf32>
    %105 = vector.extract_strided_slice %39 {offsets = [0, 384], sizes = [8, 128], strides = [1, 1]} : vector<8x512xf32> to vector<8x128xf32>
    %106 = tpu.concatenate %89, %92, %95, %98, %99, %100, %103, %104, %105 in 0 : vector<8x128xf32>, vector<8x128xf32>, vector<8x128xf32>, vector<8x128xf32>, vector<8x128xf32>, vector<8x128xf32>, vector<8x128xf32>, vector<8x128xf32>, vector<8x128xf32> -> vector<72x128xf32>
    %cst_21 = arith.constant dense<0.000000e+00> : vector<8x128xf32>
    %107 = tpu.matmul %3, %106, %cst_21 {dimension_numbers = #tpu.dot_dimension_numbers<[1], [0], [0], [1], [0, 0, 1, 1], [], []>} : vector<8x72xf32>, vector<72x128xf32>, vector<8x128xf32> -> vector<8x128xf32>
    %108 = vector.broadcast %6 : vector<8x1xf32> to vector<8x128xf32>
    %109 = arith.addf %107, %108 : vector<8x128xf32>
    %110 = vector.extract_strided_slice %109 {offsets = [0, 0], sizes = [1, 64], strides = [1, 1]} : vector<8x128xf32> to vector<1x64xf32>
    %111 = vector.extract_strided_slice %109 {offsets = [1, 0], sizes = [1, 64], strides = [1, 1]} : vector<8x128xf32> to vector<1x64xf32>
    %112 = tpu.concatenate %110, %111 in 1 : vector<1x64xf32>, vector<1x64xf32> -> vector<1x128xf32>
    %113 = vector.extract_strided_slice %109 {offsets = [2, 0], sizes = [1, 64], strides = [1, 1]} : vector<8x128xf32> to vector<1x64xf32>
    %114 = vector.extract_strided_slice %109 {offsets = [3, 0], sizes = [1, 64], strides = [1, 1]} : vector<8x128xf32> to vector<1x64xf32>
    %115 = tpu.concatenate %113, %114 in 1 : vector<1x64xf32>, vector<1x64xf32> -> vector<1x128xf32>
    %116 = vector.extract_strided_slice %109 {offsets = [4, 0], sizes = [1, 64], strides = [1, 1]} : vector<8x128xf32> to vector<1x64xf32>
    %117 = vector.extract_strided_slice %109 {offsets = [5, 0], sizes = [1, 64], strides = [1, 1]} : vector<8x128xf32> to vector<1x64xf32>
    %118 = tpu.concatenate %116, %117 in 1 : vector<1x64xf32>, vector<1x64xf32> -> vector<1x128xf32>
    %119 = vector.extract_strided_slice %109 {offsets = [6, 0], sizes = [1, 64], strides = [1, 1]} : vector<8x128xf32> to vector<1x64xf32>
    %120 = vector.extract_strided_slice %109 {offsets = [7, 0], sizes = [1, 64], strides = [1, 1]} : vector<8x128xf32> to vector<1x64xf32>
    %121 = tpu.concatenate %119, %120 in 1 : vector<1x64xf32>, vector<1x64xf32> -> vector<1x128xf32>
    %122 = vector.extract_strided_slice %109 {offsets = [0, 64], sizes = [1, 64], strides = [1, 1]} : vector<8x128xf32> to vector<1x64xf32>
    %123 = vector.extract_strided_slice %109 {offsets = [1, 64], sizes = [1, 64], strides = [1, 1]} : vector<8x128xf32> to vector<1x64xf32>
    %124 = tpu.concatenate %122, %123 in 1 : vector<1x64xf32>, vector<1x64xf32> -> vector<1x128xf32>
    %125 = vector.extract_strided_slice %109 {offsets = [2, 64], sizes = [1, 64], strides = [1, 1]} : vector<8x128xf32> to vector<1x64xf32>
    %126 = vector.extract_strided_slice %109 {offsets = [3, 64], sizes = [1, 64], strides = [1, 1]} : vector<8x128xf32> to vector<1x64xf32>
    %127 = tpu.concatenate %125, %126 in 1 : vector<1x64xf32>, vector<1x64xf32> -> vector<1x128xf32>
    %128 = vector.extract_strided_slice %109 {offsets = [4, 64], sizes = [1, 64], strides = [1, 1]} : vector<8x128xf32> to vector<1x64xf32>
    %129 = vector.extract_strided_slice %109 {offsets = [5, 64], sizes = [1, 64], strides = [1, 1]} : vector<8x128xf32> to vector<1x64xf32>
    %130 = tpu.concatenate %128, %129 in 1 : vector<1x64xf32>, vector<1x64xf32> -> vector<1x128xf32>
    %131 = vector.extract_strided_slice %109 {offsets = [6, 64], sizes = [1, 64], strides = [1, 1]} : vector<8x128xf32> to vector<1x64xf32>
    %132 = vector.extract_strided_slice %109 {offsets = [7, 64], sizes = [1, 64], strides = [1, 1]} : vector<8x128xf32> to vector<1x64xf32>
    %133 = tpu.concatenate %131, %132 in 1 : vector<1x64xf32>, vector<1x64xf32> -> vector<1x128xf32>
    %134 = tpu.concatenate %112, %115, %118, %121, %124, %127, %130, %133 in 0 : vector<1x128xf32>, vector<1x128xf32>, vector<1x128xf32>, vector<1x128xf32>, vector<1x128xf32>, vector<1x128xf32>, vector<1x128xf32>, vector<1x128xf32> -> vector<8x128xf32>
    %c0_22 = arith.constant 0 : index
    %c0_23 = arith.constant 0 : index
    %c0_24 = arith.constant 0 : index
    %135 = vector.load %arg3[%c0_22, %c0_23, %c0_24] : memref<1x8x128xf32, #tpu.memory_space<vmem>>, vector<1x8x128xf32>
    %136 = vector.shape_cast %135 : vector<1x8x128xf32> to vector<8x128xf32>
    %137 = vector.shape_cast %134 : vector<8x128xf32> to vector<1x8x128xf32>
    tpu.vector_store %arg3[%c0_22, %c0_23, %c0_24], %137 {strides = array<i32>} : memref<1x8x128xf32, #tpu.memory_space<vmem>>, vector<1x8x128xf32>,
    return
  }
  func.func @transform_0(%arg0: i32) -> (i32, i32, i32) {
    %c0_i32 = arith.constant 0 : i32
    %c0_i32_0 = arith.constant 0 : i32
    %c0_i32_1 = arith.constant 0 : i32
    return %arg0, %c0_i32, %c0_i32_0 : i32, i32, i32
  }
  func.func @transform_1(%arg0: i32) -> (i32, i32) {
    %c0_i32 = arith.constant 0 : i32
    %c0_i32_0 = arith.constant 0 : i32
    %c0_i32_1 = arith.constant 0 : i32
    return %c0_i32, %c0_i32_0 : i32, i32
  }
  func.func @transform_2(%arg0: i32) -> (i32, i32, i32) {
    %c0_i32 = arith.constant 0 : i32
    %c0_i32_0 = arith.constant 0 : i32
    %c0_i32_1 = arith.constant 0 : i32
    return %arg0, %c0_i32, %c0_i32_0 : i32, i32, i32
  }
}

</mosaic_0001>

<llo_original>
// kernel: model_forward.1
$region0: #{model_forward.1}
  #allocation0 [shape = 'u32[]', space=smem, size = 0x4, offset = 0x4, fixed_abs, tag = 'smem constant byte address 0x4 - core index']
  #allocation1 [shape = 'u32[144,128]{1,0:T(1,128)}', space=vmem, size = 0x12000, scoped, tag = 'internal scratch']
  %s0 = inlined_call_operand.vmem [shape: f32[1,4,512], index: 0, kind: input, shape index: {}]
  %s1 = inlined_call_operand.vmem [shape: f32[8,78], index: 1, kind: input, shape index: {}]
  %s2 = inlined_call_operand.vmem [shape: f32[1,8,128], index: 2, kind: output, shape index: {}]
  %s3 = sld [smem:[#allocation0]]
  $region18: #{model_forward.1} parent=0
    _
  %s5 = ssub.s32 1, %s3
  %s6 = scalar_select 0, %s5, %s3
  // Predicated region
  $region2: #{model_forward.1} parent=0 // pred_check
    _
  $region3: #{model_forward.1} parent=0 // pred_check_branch
    %8 = sbr.rel (0) target = $region5
  $region4: #{model_forward.1} parent=0 // pred_region
    _
  $region5: #{model_forward.1} parent=0 // pred_fallthru
    _
  // Predicated region
  $region6: #{model_forward.1} parent=0 // pred_check
    _
  $region7: #{model_forward.1} parent=0 // pred_check_branch
    %10 = sbr.rel (0) target = $region9
  $region8: #{model_forward.1} parent=0 // pred_region
    _
  $region9: #{model_forward.1} parent=0 // pred_fallthru
    _
  %v11 = vld [vmem:[%s0] sm:$0xff]
  %v12 = vld [vmem:[%s0 + $0x8] sm:$0xff]
  %v13 = vld [vmem:[%s1] sm:$0xff]
  %15 = vset.pattern.permute.xlu0 72
  %16 = vperm.xlu0 %15, %v13
  %v17 = vpop.permute.xlu0 %16
  %v21 = vlaneseq
  %v22 = vshrl.u32 %v21, 7
  %v23 = vsub.s32 0, %v22
  %v24 = vrot.slane %v11, %v23
  %v25 = vlaneseq
  %v26 = vshrl.u32 %v25, 7
  %v27 = vsub.s32 4, %v26
  %v28 = vrot.slane %v11, %v27
  %v29 = vlaneseq
  %v30 = vshrl.u32 %v29, 7
  %v31 = vsub.s32 0, %v30
  %v32 = vrot.slane %v12, %v31
  %v33 = vlaneseq
  %v34 = vshrl.u32 %v33, 7
  %v35 = vsub.s32 4, %v34
  %v36 = vrot.slane %v12, %v35
  %v41 = vlaneseq
  %v42 = vshrl.u32 %v41, 7
  %v43 = vsub.s32 0, %v42
  %v44 = vrot.slane %v24, %v43
  %v45 = vlaneseq
  %v46 = vshrl.u32 %v45, 7
  %v47 = vsub.s32 0, %v46
  %v48 = vrot.slane %v28, %v47
  %v49 = vlaneseq
  %v50 = vshrl.u32 %v49, 7
  %v51 = vsub.s32 0, %v50
  %v52 = vrot.slane %v32, %v51
  %v53 = vlaneseq
  %v54 = vshrl.u32 %v53, 7
  %v55 = vsub.s32 0, %v54
  %v56 = vrot.slane %v36, %v55
  %v57 = vmul.f32 %v17, %v44
  %v58 = vmul.f32 %v17, %v48
  %v59 = vmul.f32 %v17, %v52
  %v60 = vmul.f32 %v17, %v56
  %61 = vset.pattern.permute.xlu0 73
  %62 = vperm.xlu0 %61, %v13
  %v63 = vpop.permute.xlu0 %62
  %v65 = vlaneseq
  %v66 = vshrl.u32 %v65, 7
  %v67 = vsub.s32 1, %v66
  %v68 = vrot.slane %v11, %v67
  %v69 = vlaneseq
  %v70 = vshrl.u32 %v69, 7
  %v71 = vsub.s32 5, %v70
  %v72 = vrot.slane %v11, %v71
  %v73 = vlaneseq
  %v74 = vshrl.u32 %v73, 7
  %v75 = vsub.s32 1, %v74
  %v76 = vrot.slane %v12, %v75
  %v77 = vlaneseq
  %v78 = vshrl.u32 %v77, 7
  %v79 = vsub.s32 5, %v78
  %v80 = vrot.slane %v12, %v79
  %v85 = vlaneseq
  %v86 = vshrl.u32 %v85, 7
  %v87 = vsub.s32 1, %v86
  %v88 = vrot.slane %v68, %v87
  %v89 = vlaneseq
  %v90 = vshrl.u32 %v89, 7
  %v91 = vsub.s32 1, %v90
  %v92 = vrot.slane %v72, %v91
  %v93 = vlaneseq
  %v94 = vshrl.u32 %v93, 7
  %v95 = vsub.s32 1, %v94
  %v96 = vrot.slane %v76, %v95
  %v97 = vlaneseq
  %v98 = vshrl.u32 %v97, 7
  %v99 = vsub.s32 1, %v98
  %v100 = vrot.slane %v80, %v99
  %v101 = vmul.f32 %v63, %v88
  %v102 = vmul.f32 %v63, %v92
  %v103 = vmul.f32 %v63, %v96
  %v104 = vmul.f32 %v63, %v100
  %v105 = vadd.f32 %v57, %v101
  %v106 = vadd.f32 %v58, %v102
  %v107 = vadd.f32 %v59, %v103
  %v108 = vadd.f32 %v60, %v104
  %109 = vset.pattern.permute.xlu0 74
  %110 = vperm.xlu0 %109, %v13
  %v111 = vpop.permute.xlu0 %110
  %v113 = vlaneseq
  %v114 = vshrl.u32 %v113, 7
  %v115 = vsub.s32 2, %v114
  %v116 = vrot.slane %v11, %v115
  %v117 = vlaneseq
  %v118 = vshrl.u32 %v117, 7
  %v119 = vsub.s32 6, %v118
  %v120 = vrot.slane %v11, %v119
  %v121 = vlaneseq
  %v122 = vshrl.u32 %v121, 7
  %v123 = vsub.s32 2, %v122
  %v124 = vrot.slane %v12, %v123
  %v125 = vlaneseq
  %v126 = vshrl.u32 %v125, 7
  %v127 = vsub.s32 6, %v126
  %v128 = vrot.slane %v12, %v127
  %v133 = vlaneseq
  %v134 = vshrl.u32 %v133, 7
  %v135 = vsub.s32 2, %v134
  %v136 = vrot.slane %v116, %v135
  %v137 = vlaneseq
  %v138 = vshrl.u32 %v137, 7
  %v139 = vsub.s32 2, %v138
  %v140 = vrot.slane %v120, %v139
  %v141 = vlaneseq
  %v142 = vshrl.u32 %v141, 7
  %v143 = vsub.s32 2, %v142
  %v144 = vrot.slane %v124, %v143
  %v145 = vlaneseq
  %v146 = vshrl.u32 %v145, 7
  %v147 = vsub.s32 2, %v146
  %v148 = vrot.slane %v128, %v147
  %v149 = vmul.f32 %v111, %v136
  %v150 = vmul.f32 %v111, %v140
  %v151 = vmul.f32 %v111, %v144
  %v152 = vmul.f32 %v111, %v148
  %v153 = vadd.f32 %v105, %v149
  %v154 = vadd.f32 %v106, %v150
  %v155 = vadd.f32 %v107, %v151
  %v156 = vadd.f32 %v108, %v152
  %157 = vset.pattern.permute.xlu0 75
  %158 = vperm.xlu0 %157, %v13
  %v159 = vpop.permute.xlu0 %158
  %v161 = vlaneseq
  %v162 = vshrl.u32 %v161, 7
  %v163 = vsub.s32 3, %v162
  %v164 = vrot.slane %v11, %v163
  %v165 = vlaneseq
  %v166 = vshrl.u32 %v165, 7
  %v167 = vsub.s32 7, %v166
  %v168 = vrot.slane %v11, %v167
  %v169 = vlaneseq
  %v170 = vshrl.u32 %v169, 7
  %v171 = vsub.s32 3, %v170
  %v172 = vrot.slane %v12, %v171
  %v173 = vlaneseq
  %v174 = vshrl.u32 %v173, 7
  %v175 = vsub.s32 7, %v174
  %v176 = vrot.slane %v12, %v175
  %v181 = vlaneseq
  %v182 = vshrl.u32 %v181, 7
  %v183 = vsub.s32 3, %v182
  %v184 = vrot.slane %v164, %v183
  %v185 = vlaneseq
  %v186 = vshrl.u32 %v185, 7
  %v187 = vsub.s32 3, %v186
  %v188 = vrot.slane %v168, %v187
  %v189 = vlaneseq
  %v190 = vshrl.u32 %v189, 7
  %v191 = vsub.s32 3, %v190
  %v192 = vrot.slane %v172, %v191
  %v193 = vlaneseq
  %v194 = vshrl.u32 %v193, 7
  %v195 = vsub.s32 3, %v194
  %v196 = vrot.slane %v176, %v195
  %v197 = vmul.f32 %v159, %v184
  %v198 = vmul.f32 %v159, %v188
  %v199 = vmul.f32 %v159, %v192
  %v200 = vmul.f32 %v159, %v196
  %v201 = vadd.f32 %v153, %v197
  %v202 = vadd.f32 %v154, %v198
  %v203 = vadd.f32 %v155, %v199
  %v204 = vadd.f32 %v156, %v200
  %205 = vset.pattern.permute.xlu0 76
  %206 = vperm.xlu0 %205, %v13
  %v207 = vpop.permute.xlu0 %206
  %v209 = vadd.f32 %v201, %v207
  %v210 = vadd.f32 %v202, %v207
  %v211 = vadd.f32 %v203, %v207
  %v212 = vadd.f32 %v204, %v207
  %v213 = vmul.f32 %v209, 0.5
  %v214 = vmul.f32 %v210, 0.5
  %v215 = vmul.f32 %v211, 0.5
  %v216 = vmul.f32 %v212, 0.5
  %v217 = vmul.f32 %v209, 0.70710677
  %v218 = vmul.f32 %v210, 0.70710677
  %v219 = vmul.f32 %v211, 0.70710677
  %v220 = vmul.f32 %v212, 0.70710677
  %v221 = verf.f32.pop %v217
  %v222 = verf.f32.pop %v218
  %v223 = verf.f32.pop %v219
  %v224 = verf.f32.pop %v220
  %v225 = vadd.f32 %v221, 1.0
  %v226 = vadd.f32 %v222, 1.0
  %v227 = vadd.f32 %v223, 1.0
  %v228 = vadd.f32 %v224, 1.0
  %v229 = vmul.f32 %v213, %v225
  %v230 = vmul.f32 %v214, %v226
  %v231 = vmul.f32 %v215, %v227
  %v232 = vmul.f32 %v216, %v228
  %237 = vrot.lane.b32.xlu0 %v229, 1
  %v238 = vpop.permute.xlu0 %237
  %239 = vrot.lane.b32.xlu0 %v230, 1
  %v240 = vpop.permute.xlu0 %239
  %241 = vrot.lane.b32.xlu0 %v231, 1
  %v242 = vpop.permute.xlu0 %241
  %243 = vrot.lane.b32.xlu0 %v232, 1
  %v244 = vpop.permute.xlu0 %243
  %vm245 = vcmask 7168
  %v246 = vsel %vm245, %v238, %v240
  %v247 = vsel %vm245, %v242, %v244
  %250 = vrot.lane.b32.xlu0 %v230, 8
  %v251 = vpop.permute.xlu0 %250
  %252 = vrot.lane.b32.xlu0 %v231, 8
  %v253 = vpop.permute.xlu0 %252
  %254 = vrot.lane.b32.xlu0 %v232, 8
  %v255 = vpop.permute.xlu0 %254
  %vm256 = vcmask 64512
  %v257 = vsel %vm256, %v251, %v253
  %v258 = vsel %vm256, %v253, %v255
  %261 = vrot.lane.b32.xlu0 %v231, 9
  %v262 = vpop.permute.xlu0 %261
  %263 = vrot.lane.b32.xlu0 %v232, 9
  %v264 = vpop.permute.xlu0 %263
  %vm265 = vcmask 72704
  %v266 = vsel %vm265, %v262, %v264
  %v268 = vlaneseq
  %v269 = vand.u32 %v268, 127
  %vm270 = vcmp.lt.s32.totalorder %v269, 0
  %v271 = vsub.s32 0, %v269
  %v272 = vsel %vm270, %v271, %v269
  %v273 = vshrl.u32 %v272, 6
  %v274 = vand.u32 %v272, 63
  %v275 = vsub.s32 0, %v274
  %v276 = vsel %vm270, %v275, %v274
  %vm277 = vcmp.ne.s32.totalorder %v276, 0
  %vm278 = vcmp.lt.s32.totalorder %v276, 0
  %vm279 = vmand %vm278, %vm277
  %v280 = vadd.s32 %v276, 64
  %v281 = vsel %vm279, %v280, %v276
  %vm282 = vcmp.ge.s32.totalorder %v281, 8
  %vm283 = vcmp.lt.s32.totalorder %v281, 0
  %v284 = vsub.s32 0, %v281
  %v285 = vsel %vm283, %v284, %v281
  %v286 = vshrl.u32 %v285, 3
  %v287 = vand.u32 %v285, 7
  %v288 = vsub.s32 0, %v287
  %v289 = vsel %vm283, %v288, %v287
  %vm290 = vcmp.ne.s32.totalorder %v289, 0
  %vm291 = vcmp.lt.s32.totalorder %v289, 0
  %vm292 = vmand %vm291, %vm290
  %v293 = vadd.s32 %v289, 8
  %v294 = vsel %vm292, %v293, %v289
  %vm295 = vcmp.ne.s32.totalorder %v294, 0
  %vm296 = vmand %vm282, %vm295
  %v297 = vsel %vm296, %v266, 0.0
  %v298 = vsel %vm282, %v257, 0.0
  %v299 = vsel %vm282, %v258, 0.0
  %v300 = vsel %vm295, %v246, 0.0
  %v301 = vsel %vm295, %v247, 0.0
  %302 = vset.pattern.permute.xlu0 77
  %303 = vperm.xlu0 %302, %v13
  %v304 = vpop.permute.xlu0 %303
  %vm306 = vcmask 588800
  %v307 = vsel %vm306, %v13, 0
  %309 = vmatprep.subr.mxu0 0.0
  %310 = vmatpush1.msra.mxu0 0.0
  %311 = vmatprep.subr.mxu0 0.0
  %312 = vmatpush1.msra.mxu0 0.0
  %313 = vmatprep.subr.mxu0 0.0
  %314 = vmatpush1.msra.mxu0 0.0
  %315 = vmatprep.subr.mxu0 0.0
  %316 = vmatpush1.msra.mxu0 0.0
  %317 = vmatprep.subr.mxu0 0.0
  %318 = vmatpush1.msra.mxu0 0.0
  %319 = vmatprep.subr.mxu0 0.0
  %320 = vmatpush1.msra.mxu0 0.0
  %321 = vmatprep.subr.mxu0 0.0
  %322 = vmatpush1.msra.mxu0 0.0
  %323 = vmatprep.subr.mxu0 0.0
  %324 = vmatpush1.msra.mxu0 %v232
  %325 = vmatprep.subr.mxu0 0.0
  %326 = vmatpush1.msra.mxu0 %v231
  %327 = vmatprep.subr.mxu0 0.0
  %328 = vmatpush1.msra.mxu0 %v301
  %329 = vmatprep.subr.mxu0 0.0
  %330 = vmatpush1.msra.mxu0 %v230
  %331 = vmatprep.subr.mxu0 0.0
  %332 = vmatpush1.msra.mxu0 %v229
  %333 = vmatprep.subr.mxu0 0.0
  %334 = vmatpush1.msra.mxu0 %v300
  %335 = vmatprep.subr.mxu0 0.0
  %336 = vmatpush1.msra.mxu0 %v299
  %337 = vmatprep.subr.mxu0 0.0
  %338 = vmatpush1.msra.mxu0 %v298
  %339 = vmatprep.subr.mxu0 0.0
  %340 = vmatpush1.msra.mxu0 %v297
  %341 = vmatprep.subr.mxu0 0.0
  %342 = vmatpush2.msra.mxu0 0.0
  %343 = vmatprep.subr.mxu0 0.0
  %344 = vmatpush2.msra.mxu0 0.0
  %345 = vmatprep.subr.mxu0 0.0
  %346 = vmatpush2.msra.mxu0 0.0
  %347 = vmatprep.subr.mxu0 0.0
  %348 = vmatpush2.msra.mxu0 0.0
  %349 = vmatprep.subr.mxu0 0.0
  %350 = vmatpush2.msra.mxu0 0.0
  %351 = vmatprep.subr.mxu0 0.0
  %352 = vmatpush2.msra.mxu0 0.0
  %353 = vmatprep.subr.mxu0 0.0
  %354 = vmatpush2.msra.mxu0 0.0
  %355 = vmatprep.subr.mxu0 0.0
  %356 = vmatpush2.msra.mxu0 0.0
  %357 = vmatprep.subr.mxu0 0.0
  %358 = vmatpush2.msra.mxu0 0.0
  %359 = vmatprep.subr.mxu0 0.0
  %360 = vmatpush2.msra.mxu0 0.0
  %361 = vmatprep.subr.mxu0 0.0
  %362 = vmatpush2.msra.mxu0 0.0
  %363 = vmatprep.subr.mxu0 0.0
  %364 = vmatpush2.msra.mxu0 0.0
  %365 = vmatprep.subr.mxu0 0.0
  %366 = vmatpush2.msra.mxu0 0.0
  %367 = vmatprep.subr.mxu0 0.0
  %368 = vmatpush2.msra.mxu0 0.0
  %369 = vmatprep.subr.mxu0 0.0
  %370 = vmatpush2.msra.mxu0 0.0
  %371 = vmatprep.subr.mxu0 0.0
  %372 = vmatpush2.msra.mxu0 0.0
  %373 = vmatprep.mubr.f32.mxu0 0.0
  %374 = vmatmul.mubr.f32.gmra.mxu0 %v307
  %v375 = vpop.f32.mrf.mxu0
  %v376 = vadd.f32 %v304, %v375
  %v377 = vpop.f32.mrf.mxu0
  %378 = vdwg.mxu0
  %v380 = vrot.slane %v376, 1
  %381 = vrot.lane.b32.xlu0 %v380, 64
  %v382 = vpop.permute.xlu0 %381
  %vm384 = vcmask 523264
  %v385 = vsel %vm384, %v376, %v382
  %386 = vrot.lane.b32.xlu0 %v376, 64
  %v387 = vpop.permute.xlu0 %386
  %v390 = vsel %vm384, %v387, %v380
  %v392 = vrot.slane %v385, 1
  %v394 = vrot.slane %v385, 2
  %v396 = vrot.slane %v385, 3
  %v399 = vrot.slane %v390, 4
  %v401 = vrot.slane %v390, 5
  %v403 = vrot.slane %v390, 6
  %v405 = vrot.slane %v390, 7
  %vm407 = vcmask 1040384
  %v408 = vsel %vm407, %v385, %v392
  %vm409 = vcmask 1041408
  %v410 = vsel %vm409, %v408, %v394
  %vm411 = vcmask 1042432
  %v412 = vsel %vm411, %v410, %v396
  %vm413 = vcmask 1043456
  %v414 = vsel %vm413, %v412, %v399
  %vm415 = vcmask 1044480
  %v416 = vsel %vm415, %v414, %v401
  %vm417 = vcmask 1045504
  %v418 = vsel %vm417, %v416, %v403
  %vm419 = vcmask 1046528
  %v420 = vsel %vm419, %v418, %v405
  %421 = vst [vmem:[%s2] sm:$0xff] %v420
  // Predicated region
  $region10: #{model_forward.1} parent=0 // pred_check
    _
  $region11: #{model_forward.1} parent=0 // pred_check_branch
    %423 = sbr.rel (0) target = $region13
  $region12: #{model_forward.1} parent=0 // pred_region
    _
  $region13: #{model_forward.1} parent=0 // pred_fallthru
    _
  // Predicated region
  $region14: #{model_forward.1} parent=0 // pred_check
    _
  $region15: #{model_forward.1} parent=0 // pred_check_branch
    %425 = sbr.rel (0) target = $region17
  $region16: #{model_forward.1} parent=0 // pred_region
    _
  $region17: #{model_forward.1} parent=0 // pred_fallthru
    _

</llo_original>
